<compile_context>
chip_gen: v7x
topology: tpu7x:2x2x1
jax: 0.10.0
libtpu: 0.0.40
codegen_flags: <defaults>
</compile_context>

<pallas_src>
import jax
import jax.numpy as jnp
from jax.experimental import pallas as pl
from jax.experimental.pallas import tpu as pltpu


def _round_up(x, m):
    return (x + m - 1) // m * m


def two_layer_kernel(x_ref, w1_ref, b1_ref, w2_ref, b2_ref, o_ref):
    # linear1 + ReLU: bf16 MXU matmul with f32 accumulation, bias/clamp in f32.
    x_bf = x_ref[...].astype(jnp.bfloat16)
    h = jnp.dot(x_bf, w1_ref[...], preferred_element_type=jnp.float32)
    h = jnp.maximum(h + b1_ref[...], 0.0)            # .clamp(min=0)
    # linear2: bf16 MXU matmul, f32 accumulation, f32 bias add, direct store.
    y = jnp.dot(h.astype(jnp.bfloat16), w2_ref[...],
                preferred_element_type=jnp.float32)
    o_ref[...] = (y + b2_ref[...]).astype(o_ref.dtype)


def two_layer_net(x, w1t, b1, w2t, b2, *, tn=512):
    """TwoLayerNet forward.

    x   : (N, D_in)   float32
    w1t : (D_in, H)   == linear1.weight.T (bf16)    b1 : (H,)    float32
    w2t : (H, D_out)  == linear2.weight.T (bf16)    b2 : (D_out,) float32
    returns (N, D_out) float32
    """
    N, D_in = x.shape
    H = w1t.shape[1]
    D_out = w2t.shape[1]

    # ---- tile plan: row-tiled batch, >=2 even tiles for v7x megacore --------
    tn = min(tn, _round_up(N, 8))
    tiles = pl.cdiv(N, tn)
    if tiles == 1 and N > 8:
        tiles = 2                       # keep both TensorCores busy on v7x
    elif tiles > 1 and tiles % 2 == 1:
        tiles += 1                      # even tile count -> balanced megacore split
    tn = _round_up(pl.cdiv(N, tiles), 8)
    tiles = pl.cdiv(N, tn)              # ragged last tile handled by Pallas

    b1r = b1.reshape(1, H)
    b2r = b2.reshape(1, D_out)

    # ---- VMEM budget: double-buffered x/out tiles + resident weights + h ----
    f32, bf16 = 4, 2
    need = (
        2 * tn * D_in * f32                       # x tiles (double-buffered)
        + 2 * tn * D_out * f32                    # out tiles (double-buffered)
        + 2 * (D_in * H + H * D_out) * bf16       # weights (worst case: 2 bufs)
        + 2 * (H + D_out) * f32                   # biases
        + tn * H * (f32 + bf16)                   # h intermediate (+ bf16 copy)
    )
    try:
        vmem_cap = pltpu.get_tpu_info().vmem_capacity_bytes
    except Exception:
        vmem_cap = 64 * 2**20                     # v7x physical VMEM (smallest gen)
    vmem_limit = int(min(max(2 * need, 16 * 2**20), (3 * vmem_cap) // 4))

    return pl.pallas_call(
        two_layer_kernel,
        out_shape=jax.ShapeDtypeStruct((N, D_out), jnp.float32),
        grid=(tiles,),
        in_specs=[
            pl.BlockSpec((tn, D_in), lambda i: (i, 0)),     # x: row-tiled, pipelined
            pl.BlockSpec((D_in, H), lambda i: (0, 0)),      # w1t: VMEM-resident
            pl.BlockSpec((1, H), lambda i: (0, 0)),         # b1
            pl.BlockSpec((H, D_out), lambda i: (0, 0)),     # w2t: VMEM-resident
            pl.BlockSpec((1, D_out), lambda i: (0, 0)),     # b2
        ],
        out_specs=pl.BlockSpec((tn, D_out), lambda i: (i, 0)),
        compiler_params=pltpu.CompilerParams(
            dimension_semantics=("parallel",),              # megacore on v7x
            vmem_limit_bytes=vmem_limit,
        ),
    )(x, w1t, b1r, w2t, b2r)


def _init_params(key, D_in, H, D_out):
    """nn.Linear-equivalent init, stored pre-transposed ONCE and weights in bf16:
    w1t = linear1.weight.T (D_in, H), w2t = linear2.weight.T (H, D_out)."""
    k1, k2, k3, k4 = jax.random.split(key, 4)
    s1 = 1.0 / jnp.sqrt(D_in)
    s2 = 1.0 / jnp.sqrt(H)
    w1t = jax.random.uniform(k1, (D_in, H), jnp.float32, -s1, s1).astype(jnp.bfloat16)
    b1 = jax.random.uniform(k2, (H,), jnp.float32, -s1, s1)
    w2t = jax.random.uniform(k3, (H, D_out), jnp.float32, -s2, s2).astype(jnp.bfloat16)
    b2 = jax.random.uniform(k4, (D_out,), jnp.float32, -s2, s2)
    return w1t, b1, w2t, b2


if __name__ == "__main__":
    # Small shapes; N is deliberately NOT a multiple of the row tile so the
    # ragged-last-tile / multi-tile grid path is exercised (grid = 2, tn = 256).
    N, D_in, H, D_out = 500, 32, 64, 16

    key = jax.random.PRNGKey(0)
    kx, kp = jax.random.split(key)
    x = jax.random.normal(kx, (N, D_in), jnp.float32)
    w1t, b1, w2t, b2 = _init_params(kp, D_in, H, D_out)

    y = jax.block_until_ready(two_layer_net(x, w1t, b1, w2t, b2))
    assert y.shape == (N, D_out)

    # Pure-JAX reference using the same bf16-input / f32-accumulate math.
    h_ref = jnp.maximum(
        jnp.dot(x.astype(jnp.bfloat16), w1t, preferred_element_type=jnp.float32) + b1,
        0.0,
    )
    y_ref = jnp.dot(h_ref.astype(jnp.bfloat16), w2t,
                    preferred_element_type=jnp.float32) + b2
    assert jnp.allclose(y, y_ref, atol=1e-2, rtol=1e-2)

    print("KERNEL_OK")
</pallas_src>

<mosaic_0001>
module attributes {stable_mosaic.version = 11 : i64} {
  func.func @two_layer_kernel(%arg0: i32, %arg1: memref<256x32xf32, #tpu.memory_space<vmem>>, %arg2: memref<32x64xbf16, #tpu.memory_space<vmem>>, %arg3: memref<1x64xf32, #tpu.memory_space<vmem>>, %arg4: memref<64x16xbf16, #tpu.memory_space<vmem>>, %arg5: memref<1x16xf32, #tpu.memory_space<vmem>>, %arg6: memref<256x16xf32, #tpu.memory_space<vmem>>) attributes {dimension_semantics = [#tpu.dimension_semantics<parallel>], iteration_bounds = array<i64: 2>, scalar_prefetch = 0 : i64, scratch_operands = 0 : i64, tpu.core_type = #tpu.core_type<tc>, window_params = [{transform_indices = @transform_0, window_bounds = array<i64: 256, 32>}, {pipeline_mode = #tpu.pipeline_mode<synchronous>, transform_indices = @transform_1, window_bounds = array<i64: 32, 64>}, {pipeline_mode = #tpu.pipeline_mode<synchronous>, transform_indices = @transform_2, window_bounds = array<i64: 1, 64>}, {pipeline_mode = #tpu.pipeline_mode<synchronous>, transform_indices = @transform_3, window_bounds = array<i64: 64, 16>}, {pipeline_mode = #tpu.pipeline_mode<synchronous>, transform_indices = @transform_4, window_bounds = array<i64: 1, 16>}, {transform_indices = @transform_5, window_bounds = array<i64: 256, 16>}]} {
    %c0 = arith.constant 0 : index
    %c0_0 = arith.constant 0 : index
    %0 = vector.load %arg1[%c0, %c0_0] : memref<256x32xf32, #tpu.memory_space<vmem>>, vector<256x32xf32>
    %1 = arith.truncf %0 : vector<256x32xf32> to vector<256x32xbf16>
    %c0_1 = arith.constant 0 : index
    %c0_2 = arith.constant 0 : index
    %2 = vector.load %arg2[%c0_1, %c0_2] : memref<32x64xbf16, #tpu.memory_space<vmem>>, vector<32x64xbf16>
    %cst = arith.constant dense<0.000000e+00> : vector<256x64xf32>
    %3 = tpu.matmul %1, %2, %cst {dimension_numbers = #tpu.dot_dimension_numbers<[1], [0], [0], [1], [0, 0, 1, 1], [], []>} : vector<256x32xbf16>, vector<32x64xbf16>, vector<256x64xf32> -> vector<256x64xf32>
    %c0_3 = arith.constant 0 : index
    %c0_4 = arith.constant 0 : index
    %4 = vector.load %arg3[%c0_3, %c0_4] : memref<1x64xf32, #tpu.memory_space<vmem>>, vector<1x64xf32>
    %5 = vector.broadcast %4 : vector<1x64xf32> to vector<256x64xf32>
    %6 = arith.addf %3, %5 : vector<256x64xf32>
    %cst_5 = arith.constant 0.000000e+00 : f32
    %7 = vector.broadcast %cst_5 : f32 to vector<256x64xf32>
    %8 = arith.maximumf %6, %7 : vector<256x64xf32>
    %9 = arith.truncf %8 : vector<256x64xf32> to vector<256x64xbf16>
    %c0_6 = arith.constant 0 : index
    %c0_7 = arith.constant 0 : index
    %10 = vector.load %arg4[%c0_6, %c0_7] : memref<64x16xbf16, #tpu.memory_space<vmem>>, vector<64x16xbf16>
    %cst_8 = arith.constant dense<0.000000e+00> : vector<256x16xf32>
    %11 = tpu.matmul %9, %10, %cst_8 {dimension_numbers = #tpu.dot_dimension_numbers<[1], [0], [0], [1], [0, 0, 1, 1], [], []>} : vector<256x64xbf16>, vector<64x16xbf16>, vector<256x16xf32> -> vector<256x16xf32>
    %c0_9 = arith.constant 0 : index
    %c0_10 = arith.constant 0 : index
    %12 = vector.load %arg5[%c0_9, %c0_10] : memref<1x16xf32, #tpu.memory_space<vmem>>, vector<1x16xf32>
    %13 = vector.broadcast %12 : vector<1x16xf32> to vector<256x16xf32>
    %14 = arith.addf %11, %13 : vector<256x16xf32>
    %c0_11 = arith.constant 0 : index
    %c0_12 = arith.constant 0 : index
    %15 = vector.load %arg6[%c0_11, %c0_12] : memref<256x16xf32, #tpu.memory_space<vmem>>, vector<256x16xf32>
    tpu.vector_store %arg6[%c0_11, %c0_12], %14 {strides = array<i32>} : memref<256x16xf32, #tpu.memory_space<vmem>>, vector<256x16xf32>,
    return
  }
  func.func @transform_0(%arg0: i32) -> (i32, i32) {
    %c0_i32 = arith.constant 0 : i32
    %c0_i32_0 = arith.constant 0 : i32
    return %arg0, %c0_i32 : i32, i32
  }
  func.func @transform_1(%arg0: i32) -> (i32, i32) {
    %c0_i32 = arith.constant 0 : i32
    %c0_i32_0 = arith.constant 0 : i32
    %c0_i32_1 = arith.constant 0 : i32
    return %c0_i32, %c0_i32_0 : i32, i32
  }
  func.func @transform_2(%arg0: i32) -> (i32, i32) {
    %c0_i32 = arith.constant 0 : i32
    %c0_i32_0 = arith.constant 0 : i32
    %c0_i32_1 = arith.constant 0 : i32
    return %c0_i32, %c0_i32_0 : i32, i32
  }
  func.func @transform_3(%arg0: i32) -> (i32, i32) {
    %c0_i32 = arith.constant 0 : i32
    %c0_i32_0 = arith.constant 0 : i32
    %c0_i32_1 = arith.constant 0 : i32
    return %c0_i32, %c0_i32_0 : i32, i32
  }
  func.func @transform_4(%arg0: i32) -> (i32, i32) {
    %c0_i32 = arith.constant 0 : i32
    %c0_i32_0 = arith.constant 0 : i32
    %c0_i32_1 = arith.constant 0 : i32
    return %c0_i32, %c0_i32_0 : i32, i32
  }
  func.func @transform_5(%arg0: i32) -> (i32, i32) {
    %c0_i32 = arith.constant 0 : i32
    %c0_i32_0 = arith.constant 0 : i32
    return %arg0, %c0_i32 : i32, i32
  }
}

</mosaic_0001>

<llo_original>
// kernel: tpu_custom_call.1
$region0: #{tpu_custom_call.1}
  #allocation0 [shape = 'u32[]', space=smem, size = 0x4, offset = 0x4, fixed_abs, tag = 'smem constant byte address 0x4 - core index']
  #allocation1 [shape = 'u32[144,128]{1,0:T(1,128)}', space=vmem, size = 0x12000, scoped, tag = 'internal scratch']
  %s0 = inlined_call_operand.vmem [shape: f32[500,32], index: 0, kind: input, shape index: {}]
  %s1 = inlined_call_operand.vmem [shape: bf16[32,64], index: 1, kind: input, shape index: {}]
  %s2 = inlined_call_operand.vmem [shape: f32[1,64], index: 2, kind: input, shape index: {}]
  %s3 = inlined_call_operand.vmem [shape: bf16[64,16], index: 3, kind: input, shape index: {}]
  %s4 = inlined_call_operand.vmem [shape: f32[1,16], index: 4, kind: input, shape index: {}]
  %s5 = inlined_call_operand.vmem [shape: f32[500,16], index: 5, kind: output, shape index: {}]
  %s6 = sld [smem:[#allocation0]]
  $region101: #{tpu_custom_call.1} parent=0
    _
  %s8 = ssub.s32 1, %s6
  %s9 = scalar_select 0, %s8, %s6
  $region1: #{tpu_custom_call.1} parent=0
    #allocation2 [shape = 'u8[262144]{0}', space=vmem, size = 0x40000, scoped, tag = 'output window, operand 0']
    loop: start=0, step=1, limit=4
    $region2: #{tpu_custom_call.1} parent=1 // loop_pre_header
      _
    $region3: #{tpu_custom_call.1} parent=1 // loop_header
      %s11 = sphi 0, %s15
      %p12 = scmp.ge.s32.totalorder %s11, 4
      %s21 = sphi 0, %s23
      %s24 = sphi 0, %s21
      %s25 = sphi 0, %s24
      %s41 = sphi 0, %s25
      %s45 = sphi 0, %s45
      %s47 = sphi 0, %s45
      %s48 = sphi 0, %s47
      %s62 = sphi 0, %s48
      %s66 = sphi 0, %s66
      %s68 = sphi 0, %s66
      %s69 = sphi 0, %s68
      %s83 = sphi 0, %s69
      %s87 = sphi 0, %s87
      %s89 = sphi 0, %s87
      %s90 = sphi 0, %s89
      %s104 = sphi 0, %s90
      %s108 = sphi 0, %s108
      %s110 = sphi 0, %s108
      %s111 = sphi 0, %s110
      %s125 = sphi 0, %s111
      %s131 = sphi 0, %s133
      %s134 = sphi 0, %s131
      %s135 = sphi 0, %s134
      %s151 = sphi 0, %s135
    $region4: #{tpu_custom_call.1} parent=1 // loop_header_branch
      %14 = sbr.rel (%p12) target = $region8
    $region5: #{tpu_custom_call.1} parent=1 // loop_body
      %s16 = ssub.s32 %s11, 1
      %s17 = ssub.s32 %s11, 2
      %s18 = sadd.s32 %s11, 1
      %s19 = ssub.s32 %s11, %s18
      %p20 = scmp.eq.s32.totalorder %s19, 0
      %s22 = sadd.s32 %s21, 1
      %s23 = scalar_select %p20, %s21, %s22
      %p26 = pneg %p20
      %p27 = scmp.eq.s32.totalorder %s11, 1
      %p28 = por %p26, %p27
      %p29 = scmp.ne.s32.totalorder %s21, %s24
      %p30 = scmp.eq.s32.totalorder %s11, 0
      %p31 = por %p29, %p30
      %p32 = scmp.ne.s32.totalorder %s21, %s24
      %p33 = scmp.eq.s32.totalorder %s16, 1
      %p34 = por %p32, %p33
      %p35 = scmp.ne.s32.totalorder %s24, %s25
      %p36 = scmp.eq.s32.totalorder %s16, 0
      %p37 = por %p35, %p36
      %p38 = scmp.ne.s32.totalorder %s24, %s25
      %p39 = scmp.eq.s32.totalorder %s17, 1
      %p40 = por %p38, %p39
      %p42 = scmp.ne.s32.totalorder %s25, %s41
      %p43 = scmp.eq.s32.totalorder %s17, 0
      %p44 = por %p42, %p43
      %s46 = sadd.s32 %s45, 1
      %p49 = scmp.eq.s32.totalorder %s11, 1
      %p50 = scmp.ne.s32.totalorder %s45, %s47
      %p51 = scmp.eq.s32.totalorder %s11, 0
      %p52 = por %p50, %p51
      %p53 = scmp.ne.s32.totalorder %s45, %s47
      %p54 = scmp.eq.s32.totalorder %s16, 1
      %p55 = por %p53, %p54
      %p56 = scmp.ne.s32.totalorder %s47, %s48
      %p57 = scmp.eq.s32.totalorder %s16, 0
      %p58 = por %p56, %p57
      %p59 = scmp.ne.s32.totalorder %s47, %s48
      %p60 = scmp.eq.s32.totalorder %s17, 1
      %p61 = por %p59, %p60
      %p63 = scmp.ne.s32.totalorder %s48, %s62
      %p64 = scmp.eq.s32.totalorder %s17, 0
      %p65 = por %p63, %p64
      %s67 = sadd.s32 %s66, 1
      %p70 = scmp.eq.s32.totalorder %s11, 1
      %p71 = scmp.ne.s32.totalorder %s66, %s68
      %p72 = scmp.eq.s32.totalorder %s11, 0
      %p73 = por %p71, %p72
      %p74 = scmp.ne.s32.totalorder %s66, %s68
      %p75 = scmp.eq.s32.totalorder %s16, 1
      %p76 = por %p74, %p75
      %p77 = scmp.ne.s32.totalorder %s68, %s69
      %p78 = scmp.eq.s32.totalorder %s16, 0
      %p79 = por %p77, %p78
      %p80 = scmp.ne.s32.totalorder %s68, %s69
      %p81 = scmp.eq.s32.totalorder %s17, 1
      %p82 = por %p80, %p81
      %p84 = scmp.ne.s32.totalorder %s69, %s83
      %p85 = scmp.eq.s32.totalorder %s17, 0
      %p86 = por %p84, %p85
      %s88 = sadd.s32 %s87, 1
      %p91 = scmp.eq.s32.totalorder %s11, 1
      %p92 = scmp.ne.s32.totalorder %s87, %s89
      %p93 = scmp.eq.s32.totalorder %s11, 0
      %p94 = por %p92, %p93
      %p95 = scmp.ne.s32.totalorder %s87, %s89
      %p96 = scmp.eq.s32.totalorder %s16, 1
      %p97 = por %p95, %p96
      %p98 = scmp.ne.s32.totalorder %s89, %s90
      %p99 = scmp.eq.s32.totalorder %s16, 0
      %p100 = por %p98, %p99
      %p101 = scmp.ne.s32.totalorder %s89, %s90
      %p102 = scmp.eq.s32.totalorder %s17, 1
      %p103 = por %p101, %p102
      %p105 = scmp.ne.s32.totalorder %s90, %s104
      %p106 = scmp.eq.s32.totalorder %s17, 0
      %p107 = por %p105, %p106
      %s109 = sadd.s32 %s108, 1
      %p112 = scmp.eq.s32.totalorder %s11, 1
      %p113 = scmp.ne.s32.totalorder %s108, %s110
      %p114 = scmp.eq.s32.totalorder %s11, 0
      %p115 = por %p113, %p114
      %p116 = scmp.ne.s32.totalorder %s108, %s110
      %p117 = scmp.eq.s32.totalorder %s16, 1
      %p118 = por %p116, %p117
      %p119 = scmp.ne.s32.totalorder %s110, %s111
      %p120 = scmp.eq.s32.totalorder %s16, 0
      %p121 = por %p119, %p120
      %p122 = scmp.ne.s32.totalorder %s110, %s111
      %p123 = scmp.eq.s32.totalorder %s17, 1
      %p124 = por %p122, %p123
      %p126 = scmp.ne.s32.totalorder %s111, %s125
      %p127 = scmp.eq.s32.totalorder %s17, 0
      %p128 = por %p126, %p127
      %s129 = ssub.s32 %s11, %s18
      %p130 = scmp.eq.s32.totalorder %s129, 0
      %s132 = sadd.s32 %s131, 1
      %s133 = scalar_select %p130, %s131, %s132
      %p136 = pneg %p130
      %p137 = scmp.eq.s32.totalorder %s11, 1
      %p138 = por %p136, %p137
      %p139 = scmp.ne.s32.totalorder %s131, %s134
      %p140 = scmp.eq.s32.totalorder %s11, 0
      %p141 = por %p139, %p140
      %p142 = scmp.ne.s32.totalorder %s131, %s134
      %p143 = scmp.eq.s32.totalorder %s16, 1
      %p144 = por %p142, %p143
      %p145 = scmp.ne.s32.totalorder %s134, %s135
      %p146 = scmp.eq.s32.totalorder %s16, 0
      %p147 = por %p145, %p146
      %p148 = scmp.ne.s32.totalorder %s134, %s135
      %p149 = scmp.eq.s32.totalorder %s17, 1
      %p150 = por %p148, %p149
      %p152 = scmp.ne.s32.totalorder %s135, %s151
      %p153 = scmp.eq.s32.totalorder %s17, 0
      %p154 = por %p152, %p153
      %p155 = scmp.le.s32.totalorder 1, %s11
      %p156 = scmp.lt.s32.totalorder %s11, 3
      %p157 = pnand %p155, %p156
      %p158 = pneg %p157
      // Predicated region
      $region9: #{tpu_custom_call.1} parent=5 // pred_check
        _
      $region10: #{tpu_custom_call.1} parent=5 // pred_check_branch
        %160 = sbr.rel (%p157) target = $region12
      $region11: #{tpu_custom_call.1} parent=5 // pred_region
        %s161 = ssub.s32 %s11, 1
        // Predicated region
        $region13: #{tpu_custom_call.1} parent=11 // pred_check
          %p162 = pneg %p58
        $region14: #{tpu_custom_call.1} parent=11 // pred_check_branch
          %164 = sbr.rel (%p162) target = $region16
        $region15: #{tpu_custom_call.1} parent=11 // pred_region
          _
        $region16: #{tpu_custom_call.1} parent=11 // pred_fallthru
          _
        // Predicated region
        $region17: #{tpu_custom_call.1} parent=11 // pred_check
          %p165 = pneg %p79
        $region18: #{tpu_custom_call.1} parent=11 // pred_check_branch
          %167 = sbr.rel (%p165) target = $region20
        $region19: #{tpu_custom_call.1} parent=11 // pred_region
          _
        $region20: #{tpu_custom_call.1} parent=11 // pred_fallthru
          _
        // Predicated region
        $region21: #{tpu_custom_call.1} parent=11 // pred_check
          %p168 = pneg %p100
        $region22: #{tpu_custom_call.1} parent=11 // pred_check_branch
          %170 = sbr.rel (%p168) target = $region24
        $region23: #{tpu_custom_call.1} parent=11 // pred_region
          _
        $region24: #{tpu_custom_call.1} parent=11 // pred_fallthru
          _
        // Predicated region
        $region25: #{tpu_custom_call.1} parent=11 // pred_check
          %p171 = pneg %p121
        $region26: #{tpu_custom_call.1} parent=11 // pred_check_branch
          %173 = sbr.rel (%p171) target = $region28
        $region27: #{tpu_custom_call.1} parent=11 // pred_region
          _
        $region28: #{tpu_custom_call.1} parent=11 // pred_fallthru
          _
      $region12: #{tpu_custom_call.1} parent=5 // pred_fallthru
        _
      %p174 = scmp.lt.s32.totalorder %s11, 2
      // Predicated region
      $region29: #{tpu_custom_call.1} parent=5 // pred_check
        %p175 = pneg %p174
      $region30: #{tpu_custom_call.1} parent=5 // pred_check_branch
        %177 = sbr.rel (%p175) target = $region32
      $region31: #{tpu_custom_call.1} parent=5 // pred_region
        // Predicated region
        $region33: #{tpu_custom_call.1} parent=31 // pred_check
          %p178 = pneg %p31
        $region34: #{tpu_custom_call.1} parent=31 // pred_check_branch
          %180 = sbr.rel (%p178) target = $region36
        $region35: #{tpu_custom_call.1} parent=31 // pred_region
          %s181 = smul.u32 32, %s11
          %s182 = ssub.s32 63, %s181
          %p183 = scmp.lt.s32.totalorder %s182, 32
          %s184 = scalar_select %p183, %s182, 32
          %s185 = smul.u32 128, %s184
          %p186 = scmp.lt.s32.totalorder %s181, 62
          %s187 = scalar_select %p186, %s181, 62
          %s188 = smul.addr %s187, 8
          %s189 = scalar_lea.vmem %s0, %s188
          %s190 = smul.u32 32, %s11
          %s191 = ssub.s32 63, %s190
          %p192 = scmp.lt.s32.totalorder %s191, 32
          %s193 = scalar_select %p192, %s191, 32
          %s194 = smul.u32 128, %s193
        $region36: #{tpu_custom_call.1} parent=31 // pred_fallthru
          _
      $region32: #{tpu_custom_call.1} parent=5 // pred_fallthru
        _
      %p195 = scmp.le.s32.totalorder 1, %s11
      %p196 = scmp.lt.s32.totalorder %s11, 3
      %p197 = pnand %p195, %p196
      %p198 = pneg %p197
      // Predicated region
      $region37: #{tpu_custom_call.1} parent=5 // pred_check
        _
      $region38: #{tpu_custom_call.1} parent=5 // pred_check_branch
        %200 = sbr.rel (%p197) target = $region40
      $region39: #{tpu_custom_call.1} parent=5 // pred_region
        %s201 = ssub.s32 %s11, 1
        %s202 = smul.u32 32, %s16
        %s203 = ssub.s32 63, %s202
        %p204 = scmp.lt.s32.totalorder %s203, 32
        %s205 = scalar_select %p204, %s203, 32
        %s206 = smul.u32 128, %s205
        %p207 = scmp.lt.s32.totalorder %s202, 62
        %s208 = scalar_select %p207, %s202, 62
        %s209 = smul.addr %s208, 8
        %s210 = scalar_lea.vmem %s0, %s209
        %p211 = pneg %p37
        %p212 = pneg %p34
        %p213 = pneg %p58
        %p214 = pneg %p55
        %p215 = pneg %p79
        %p216 = pneg %p76
        %p217 = pneg %p100
        %p218 = pneg %p97
        %p219 = pneg %p121
        %p220 = pneg %p118
        %p221 = pneg %p147
        %p222 = pneg %p144
        %s223 = sand.u32 %s134, 1
        %s224 = sand.u32 %s134, 1
        %s225 = smul.addr %s224, 256
        %s226 = scalar_lea.vmem [#allocation2], %s225
        %s227 = smul.u32 32, %s16
        %s228 = ssub.s32 63, %s227
        %p229 = scmp.lt.s32.totalorder %s228, 32
        %s230 = scalar_select %p229, %s228, 32
        %s231 = smul.u32 128, %s230
        %p232 = scmp.lt.s32.totalorder %s227, 62
        %s233 = scalar_select %p232, %s227, 62
        %s234 = smul.addr %s233, 8
        %s235 = scalar_lea.vmem %s0, %s234
        %s236 = smul.u32 32, %s16
        %s237 = ssub.s32 63, %s236
        %p238 = scmp.lt.s32.totalorder %s237, 32
        %s239 = scalar_select %p238, %s237, 32
        %s240 = smul.u32 128, %s239
        %s241 = smul.u32 32, %s16
        %s242 = ssub.s32 63, %s241
        %p243 = scmp.lt.s32.totalorder %s242, 32
        %s244 = scalar_select %p243, %s242, 32
        %s245 = smul.u32 128, %s244
        %v247 = vld [vmem:[%s235] sm:$0xff]
        %v248 = vld [vmem:[%s235 + $0x8] sm:$0xff]
        %v249 = vld [vmem:[%s235 + $0x10] sm:$0xff]
        %v250 = vld [vmem:[%s235 + $0x18] sm:$0xff]
        %v251 = vld [vmem:[%s235 + $0x20] sm:$0xff]
        %v252 = vld [vmem:[%s235 + $0x28] sm:$0xff]
        %v253 = vld [vmem:[%s235 + $0x30] sm:$0xff]
        %v254 = vld [vmem:[%s235 + $0x38] sm:$0xff]
        %v255 = vld [vmem:[%s235 + $0x40] sm:$0xff]
        %v256 = vld [vmem:[%s235 + $0x48] sm:$0xff]
        %v257 = vld [vmem:[%s235 + $0x50] sm:$0xff]
        %v258 = vld [vmem:[%s235 + $0x58] sm:$0xff]
        %v259 = vld [vmem:[%s235 + $0x60] sm:$0xff]
        %v260 = vld [vmem:[%s235 + $0x68] sm:$0xff]
        %v261 = vld [vmem:[%s235 + $0x70] sm:$0xff]
        %v262 = vld [vmem:[%s235 + $0x78] sm:$0xff]
        %v263 = vld [vmem:[%s235 + $0x80] sm:$0xff]
        %v264 = vld [vmem:[%s235 + $0x88] sm:$0xff]
        %v265 = vld [vmem:[%s235 + $0x90] sm:$0xff]
        %v266 = vld [vmem:[%s235 + $0x98] sm:$0xff]
        %v267 = vld [vmem:[%s235 + $0xa0] sm:$0xff]
        %v268 = vld [vmem:[%s235 + $0xa8] sm:$0xff]
        %v269 = vld [vmem:[%s235 + $0xb0] sm:$0xff]
        %v270 = vld [vmem:[%s235 + $0xb8] sm:$0xff]
        %v271 = vld [vmem:[%s235 + $0xc0] sm:$0xff]
        %v272 = vld [vmem:[%s235 + $0xc8] sm:$0xff]
        %v273 = vld [vmem:[%s235 + $0xd0] sm:$0xff]
        %v274 = vld [vmem:[%s235 + $0xd8] sm:$0xff]
        %v275 = vld [vmem:[%s235 + $0xe0] sm:$0xff]
        %v276 = vld [vmem:[%s235 + $0xe8] sm:$0xff]
        %v277 = vld [vmem:[%s235 + $0xf0] sm:$0xff]
        %v278 = vld [vmem:[%s235 + $0xf8] sm:$0xff]
        %v279 = vpack.c.bf16 %v248, %v247
        %v280 = vpack.c.bf16 %v250, %v249
        %v281 = vpack.c.bf16 %v252, %v251
        %v282 = vpack.c.bf16 %v254, %v253
        %v283 = vpack.c.bf16 %v256, %v255
        %v284 = vpack.c.bf16 %v258, %v257
        %v285 = vpack.c.bf16 %v260, %v259
        %v286 = vpack.c.bf16 %v262, %v261
        %v287 = vpack.c.bf16 %v264, %v263
        %v288 = vpack.c.bf16 %v266, %v265
        %v289 = vpack.c.bf16 %v268, %v267
        %v290 = vpack.c.bf16 %v270, %v269
        %v291 = vpack.c.bf16 %v272, %v271
        %v292 = vpack.c.bf16 %v274, %v273
        %v293 = vpack.c.bf16 %v276, %v275
        %v294 = vpack.c.bf16 %v278, %v277
        %v295 = vld [vmem:[%s1] sm:$0xf]
        %v296 = vld [vmem:[%s1 + $0x4] sm:$0xf]
        %v297 = vld [vmem:[%s1 + $0x8] sm:$0xf]
        %v298 = vld [vmem:[%s1 + $0xc] sm:$0xf]
        %v299 = vld [vmem:[%s2] sm:$0x1]
        %v301 = vlaneseq
        %v302 = vshrl.u32 %v301, 7
        %v303 = vsub.s32 0, %v302
        %v304 = vrot.slane %v299, %v303
        %v310 = vunpack.c.l.b16 %v295
        %v311 = vunpack.c.l.b16 %v296
        %v312 = vunpack.c.l.b16 %v297
        %v313 = vunpack.c.l.b16 %v298
        %v314 = vpack.c.b16 %v311, %v310
        %v315 = vpack.c.b16 %v313, %v312
        %vm318 = vcmask 261120
        %v320 = vsel %vm318, %v279, 0
        %v323 = vsel %vm318, %v280, 0
        %v326 = vsel %vm318, %v281, 0
        %v329 = vsel %vm318, %v282, 0
        %v332 = vsel %vm318, %v283, 0
        %v335 = vsel %vm318, %v284, 0
        %v338 = vsel %vm318, %v285, 0
        %v341 = vsel %vm318, %v286, 0
        %v344 = vsel %vm318, %v287, 0
        %v347 = vsel %vm318, %v288, 0
        %v350 = vsel %vm318, %v289, 0
        %v353 = vsel %vm318, %v290, 0
        %v356 = vsel %vm318, %v291, 0
        %v359 = vsel %vm318, %v292, 0
        %v362 = vsel %vm318, %v293, 0
        %v365 = vsel %vm318, %v294, 0
        %367 = vmatprep.subr.bf16.mxu0 0
        %368 = vmatpush1.bf16.msra.mxu0 %v314
        %369 = vmatprep.subr.bf16.mxu0 0
        %370 = vmatpush1.bf16.msra.mxu0 %v315
        %371 = vmatprep.subr.bf16.mxu0 0
        %372 = vmatpush1.bf16.msra.mxu0 0
        %373 = vmatprep.subr.bf16.mxu0 0
        %374 = vmatpush1.bf16.msra.mxu0 0
        %375 = vmatprep.subr.bf16.mxu0 0
        %376 = vmatpush1.bf16.msra.mxu0 0
        %377 = vmatprep.subr.bf16.mxu0 0
        %378 = vmatpush1.bf16.msra.mxu0 0
        %379 = vmatprep.subr.bf16.mxu0 0
        %380 = vmatpush1.bf16.msra.mxu0 0
        %381 = vmatprep.subr.bf16.mxu0 0
        %382 = vmatpush1.bf16.msra.mxu0 0
        %383 = vmatprep.subr.bf16.mxu0 0
        %384 = vmatpush1.bf16.msra.mxu0 0
        %385 = vmatprep.subr.bf16.mxu0 0
        %386 = vmatpush1.bf16.msra.mxu0 0
        %387 = vmatprep.subr.bf16.mxu0 0
        %388 = vmatpush1.bf16.msra.mxu0 0
        %389 = vmatprep.subr.bf16.mxu0 0
        %390 = vmatpush1.bf16.msra.mxu0 0
        %391 = vmatprep.subr.bf16.mxu0 0
        %392 = vmatpush1.bf16.msra.mxu0 0
        %393 = vmatprep.subr.bf16.mxu0 0
        %394 = vmatpush1.bf16.msra.mxu0 0
        %395 = vmatprep.subr.bf16.mxu0 0
        %396 = vmatpush1.bf16.msra.mxu0 0
        %397 = vmatprep.subr.bf16.mxu0 0
        %398 = vmatpush1.bf16.msra.mxu0 0
        %399 = vmatprep.mubr.bf16.mxu0 0
        %400 = vmatmul.mubr.bf16.gmra.mrb[0].mxu0 %v320
        %v401 = vpop.f32.mrb[0].mxu0
        %v402 = vadd.f32 %v304, %v401
        %v403 = vpop.f32.mrb[0].mxu0
        %v404 = vpop.f32.mrb[0].mxu0
        %v405 = vadd.f32 %v304, %v404
        %v406 = vpop.f32.mrb[0].mxu0
        %407 = vmatprep.mubr.bf16.mxu0 0
        %408 = vmatmul.mubr.bf16.gmra.mrb[0].mxu0 %v323
        %v409 = vpop.f32.mrb[0].mxu0
        %v410 = vadd.f32 %v304, %v409
        %v411 = vpop.f32.mrb[0].mxu0
        %v412 = vpop.f32.mrb[0].mxu0
        %v413 = vadd.f32 %v304, %v412
        %v414 = vpop.f32.mrb[0].mxu0
        %415 = vmatprep.mubr.bf16.mxu0 0
        %416 = vmatmul.mubr.bf16.gmra.mrb[0].mxu0 %v326
        %v417 = vpop.f32.mrb[0].mxu0
        %v418 = vadd.f32 %v304, %v417
        %v419 = vpop.f32.mrb[0].mxu0
        %v420 = vpop.f32.mrb[0].mxu0
        %v421 = vadd.f32 %v304, %v420
        %v422 = vpop.f32.mrb[0].mxu0
        %423 = vmatprep.mubr.bf16.mxu0 0
        %424 = vmatmul.mubr.bf16.gmra.mrb[0].mxu0 %v329
        %v425 = vpop.f32.mrb[0].mxu0
        %v426 = vadd.f32 %v304, %v425
        %v427 = vpop.f32.mrb[0].mxu0
        %v428 = vpop.f32.mrb[0].mxu0
        %v429 = vadd.f32 %v304, %v428
        %v430 = vpop.f32.mrb[0].mxu0
        %431 = vmatprep.mubr.bf16.mxu0 0
        %432 = vmatmul.mubr.bf16.gmra.mrb[0].mxu0 %v332
        %v433 = vpop.f32.mrb[0].mxu0
        %v434 = vadd.f32 %v304, %v433
        %v435 = vpop.f32.mrb[0].mxu0
        %v436 = vpop.f32.mrb[0].mxu0
        %v437 = vadd.f32 %v304, %v436
        %v438 = vpop.f32.mrb[0].mxu0
        %439 = vmatprep.mubr.bf16.mxu0 0
        %440 = vmatmul.mubr.bf16.gmra.mrb[0].mxu0 %v335
        %v441 = vpop.f32.mrb[0].mxu0
        %v442 = vadd.f32 %v304, %v441
        %v443 = vpop.f32.mrb[0].mxu0
        %v444 = vpop.f32.mrb[0].mxu0
        %v445 = vadd.f32 %v304, %v444
        %v446 = vpop.f32.mrb[0].mxu0
        %447 = vmatprep.mubr.bf16.mxu0 0
        %448 = vmatmul.mubr.bf16.gmra.mrb[0].mxu0 %v338
        %v449 = vpop.f32.mrb[0].mxu0
        %v450 = vadd.f32 %v304, %v449
        %v451 = vpop.f32.mrb[0].mxu0
        %v452 = vpop.f32.mrb[0].mxu0
        %v453 = vadd.f32 %v304, %v452
        %v454 = vpop.f32.mrb[0].mxu0
        %455 = vmatprep.mubr.bf16.mxu0 0
        %456 = vmatmul.mubr.bf16.gmra.mrb[0].mxu0 %v341
        %v457 = vpop.f32.mrb[0].mxu0
        %v458 = vadd.f32 %v304, %v457
        %v459 = vpop.f32.mrb[0].mxu0
        %v460 = vpop.f32.mrb[0].mxu0
        %v461 = vadd.f32 %v304, %v460
        %v462 = vpop.f32.mrb[0].mxu0
        %463 = vmatprep.mubr.bf16.mxu0 0
        %464 = vmatmul.mubr.bf16.gmra.mrb[0].mxu0 %v344
        %v465 = vpop.f32.mrb[0].mxu0
        %v466 = vadd.f32 %v304, %v465
        %v467 = vpop.f32.mrb[0].mxu0
        %v468 = vpop.f32.mrb[0].mxu0
        %v469 = vadd.f32 %v304, %v468
        %v470 = vpop.f32.mrb[0].mxu0
        %471 = vmatprep.mubr.bf16.mxu0 0
        %472 = vmatmul.mubr.bf16.gmra.mrb[0].mxu0 %v347
        %v473 = vpop.f32.mrb[0].mxu0
        %v474 = vadd.f32 %v304, %v473
        %v475 = vpop.f32.mrb[0].mxu0
        %v476 = vpop.f32.mrb[0].mxu0
        %v477 = vadd.f32 %v304, %v476
        %v478 = vpop.f32.mrb[0].mxu0
        %479 = vmatprep.mubr.bf16.mxu0 0
        %480 = vmatmul.mubr.bf16.gmra.mrb[0].mxu0 %v350
        %v481 = vpop.f32.mrb[0].mxu0
        %v482 = vadd.f32 %v304, %v481
        %v483 = vpop.f32.mrb[0].mxu0
        %v484 = vpop.f32.mrb[0].mxu0
        %v485 = vadd.f32 %v304, %v484
        %v486 = vpop.f32.mrb[0].mxu0
        %487 = vmatprep.mubr.bf16.mxu0 0
        %488 = vmatmul.mubr.bf16.gmra.mrb[0].mxu0 %v353
        %v489 = vpop.f32.mrb[0].mxu0
        %v490 = vadd.f32 %v304, %v489
        %v491 = vpop.f32.mrb[0].mxu0
        %v492 = vpop.f32.mrb[0].mxu0
        %v493 = vadd.f32 %v304, %v492
        %v494 = vpop.f32.mrb[0].mxu0
        %495 = vmatprep.mubr.bf16.mxu0 0
        %496 = vmatmul.mubr.bf16.gmra.mrb[0].mxu0 %v356
        %v497 = vpop.f32.mrb[0].mxu0
        %v498 = vadd.f32 %v304, %v497
        %v499 = vpop.f32.mrb[0].mxu0
        %v500 = vpop.f32.mrb[0].mxu0
        %v501 = vadd.f32 %v304, %v500
        %v502 = vpop.f32.mrb[0].mxu0
        %503 = vmatprep.mubr.bf16.mxu0 0
        %504 = vmatmul.mubr.bf16.gmra.mrb[0].mxu0 %v359
        %v505 = vpop.f32.mrb[0].mxu0
        %v506 = vadd.f32 %v304, %v505
        %v507 = vpop.f32.mrb[0].mxu0
        %v508 = vpop.f32.mrb[0].mxu0
        %v509 = vadd.f32 %v304, %v508
        %v510 = vpop.f32.mrb[0].mxu0
        %511 = vmatprep.mubr.bf16.mxu0 0
        %512 = vmatmul.mubr.bf16.gmra.mrb[0].mxu0 %v362
        %v513 = vpop.f32.mrb[0].mxu0
        %v514 = vadd.f32 %v304, %v513
        %v515 = vpop.f32.mrb[0].mxu0
        %v516 = vpop.f32.mrb[0].mxu0
        %v517 = vadd.f32 %v304, %v516
        %v518 = vpop.f32.mrb[0].mxu0
        %519 = vmatprep.mubr.bf16.mxu0 0
        %520 = vmatmul.mubr.bf16.gmra.mrb[0].mxu0 %v365
        %v521 = vpop.f32.mrb[0].mxu0
        %v522 = vadd.f32 %v304, %v521
        %v523 = vpop.f32.mrb[0].mxu0
        %v524 = vpop.f32.mrb[0].mxu0
        %v525 = vadd.f32 %v304, %v524
        %v526 = vpop.f32.mrb[0].mxu0
        %527 = vdwg.mxu0
        %v528 = vmax.f32 %v402, 0.0
        %v529 = vmax.f32 %v405, 0.0
        %v530 = vmax.f32 %v410, 0.0
        %v531 = vmax.f32 %v413, 0.0
        %v532 = vmax.f32 %v418, 0.0
        %v533 = vmax.f32 %v421, 0.0
        %v534 = vmax.f32 %v426, 0.0
        %v535 = vmax.f32 %v429, 0.0
        %v536 = vmax.f32 %v434, 0.0
        %v537 = vmax.f32 %v437, 0.0
        %v538 = vmax.f32 %v442, 0.0
        %v539 = vmax.f32 %v445, 0.0
        %v540 = vmax.f32 %v450, 0.0
        %v541 = vmax.f32 %v453, 0.0
        %v542 = vmax.f32 %v458, 0.0
        %v543 = vmax.f32 %v461, 0.0
        %v544 = vmax.f32 %v466, 0.0
        %v545 = vmax.f32 %v469, 0.0
        %v546 = vmax.f32 %v474, 0.0
        %v547 = vmax.f32 %v477, 0.0
        %v548 = vmax.f32 %v482, 0.0
        %v549 = vmax.f32 %v485, 0.0
        %v550 = vmax.f32 %v490, 0.0
        %v551 = vmax.f32 %v493, 0.0
        %v552 = vmax.f32 %v498, 0.0
        %v553 = vmax.f32 %v501, 0.0
        %v554 = vmax.f32 %v506, 0.0
        %v555 = vmax.f32 %v509, 0.0
        %v556 = vmax.f32 %v514, 0.0
        %v557 = vmax.f32 %v517, 0.0
        %v558 = vmax.f32 %v522, 0.0
        %v559 = vmax.f32 %v525, 0.0
        %v560 = vpack.c.bf16 %v529, %v528
        %v561 = vpack.c.bf16 %v531, %v530
        %v562 = vpack.c.bf16 %v533, %v532
        %v563 = vpack.c.bf16 %v535, %v534
        %v564 = vpack.c.bf16 %v537, %v536
        %v565 = vpack.c.bf16 %v539, %v538
        %v566 = vpack.c.bf16 %v541, %v540
        %v567 = vpack.c.bf16 %v543, %v542
        %v568 = vpack.c.bf16 %v545, %v544
        %v569 = vpack.c.bf16 %v547, %v546
        %v570 = vpack.c.bf16 %v549, %v548
        %v571 = vpack.c.bf16 %v551, %v550
        %v572 = vpack.c.bf16 %v553, %v552
        %v573 = vpack.c.bf16 %v555, %v554
        %v574 = vpack.c.bf16 %v557, %v556
        %v575 = vpack.c.bf16 %v559, %v558
        %v576 = vld [vmem:[%s3] sm:$0xf]
        %v577 = vld [vmem:[%s3 + $0x4] sm:$0xf]
        %v578 = vld [vmem:[%s3 + $0x8] sm:$0xf]
        %v579 = vld [vmem:[%s3 + $0xc] sm:$0xf]
        %v580 = vld [vmem:[%s3 + $0x10] sm:$0xf]
        %v581 = vld [vmem:[%s3 + $0x14] sm:$0xf]
        %v582 = vld [vmem:[%s3 + $0x18] sm:$0xf]
        %v583 = vld [vmem:[%s3 + $0x1c] sm:$0xf]
        %v584 = vld [vmem:[%s4] sm:$0x1]
        %v586 = vlaneseq
        %v587 = vshrl.u32 %v586, 7
        %v588 = vsub.s32 0, %v587
        %v589 = vrot.slane %v584, %v588
        %v599 = vunpack.c.l.b16 %v576
        %v600 = vunpack.c.l.b16 %v577
        %v601 = vunpack.c.l.b16 %v578
        %v602 = vunpack.c.l.b16 %v579
        %v603 = vunpack.c.l.b16 %v580
        %v604 = vunpack.c.l.b16 %v581
        %v605 = vunpack.c.l.b16 %v582
        %v606 = vunpack.c.l.b16 %v583
        %v607 = vpack.c.b16 %v600, %v599
        %v608 = vpack.c.b16 %v602, %v601
        %v609 = vpack.c.b16 %v604, %v603
        %v610 = vpack.c.b16 %v606, %v605
        %vm615 = vcmask 523264
        %v617 = vsel %vm615, %v560, 0
        %v620 = vsel %vm615, %v561, 0
        %v623 = vsel %vm615, %v562, 0
        %v626 = vsel %vm615, %v563, 0
        %v629 = vsel %vm615, %v564, 0
        %v632 = vsel %vm615, %v565, 0
        %v635 = vsel %vm615, %v566, 0
        %v638 = vsel %vm615, %v567, 0
        %v641 = vsel %vm615, %v568, 0
        %v644 = vsel %vm615, %v569, 0
        %v647 = vsel %vm615, %v570, 0
        %v650 = vsel %vm615, %v571, 0
        %v653 = vsel %vm615, %v572, 0
        %v656 = vsel %vm615, %v573, 0
        %v659 = vsel %vm615, %v574, 0
        %v662 = vsel %vm615, %v575, 0
        %664 = vmatprep.subr.bf16.mxu0 0
        %665 = vmatpush1.bf16.msra.mxu0 %v607
        %666 = vmatprep.subr.bf16.mxu0 0
        %667 = vmatpush1.bf16.msra.mxu0 %v608
        %668 = vmatprep.subr.bf16.mxu0 0
        %669 = vmatpush1.bf16.msra.mxu0 %v609
        %670 = vmatprep.subr.bf16.mxu0 0
        %671 = vmatpush1.bf16.msra.mxu0 %v610
        %672 = vmatprep.subr.bf16.mxu0 0
        %673 = vmatpush1.bf16.msra.mxu0 0
        %674 = vmatprep.subr.bf16.mxu0 0
        %675 = vmatpush1.bf16.msra.mxu0 0
        %676 = vmatprep.subr.bf16.mxu0 0
        %677 = vmatpush1.bf16.msra.mxu0 0
        %678 = vmatprep.subr.bf16.mxu0 0
        %679 = vmatpush1.bf16.msra.mxu0 0
        %680 = vmatprep.subr.bf16.mxu0 0
        %681 = vmatpush1.bf16.msra.mxu0 0
        %682 = vmatprep.subr.bf16.mxu0 0
        %683 = vmatpush1.bf16.msra.mxu0 0
        %684 = vmatprep.subr.bf16.mxu0 0
        %685 = vmatpush1.bf16.msra.mxu0 0
        %686 = vmatprep.subr.bf16.mxu0 0
        %687 = vmatpush1.bf16.msra.mxu0 0
        %688 = vmatprep.subr.bf16.mxu0 0
        %689 = vmatpush1.bf16.msra.mxu0 0
        %690 = vmatprep.subr.bf16.mxu0 0
        %691 = vmatpush1.bf16.msra.mxu0 0
        %692 = vmatprep.subr.bf16.mxu0 0
        %693 = vmatpush1.bf16.msra.mxu0 0
        %694 = vmatprep.subr.bf16.mxu0 0
        %695 = vmatpush1.bf16.msra.mxu0 0
        %696 = vmatprep.mubr.bf16.mxu0 0
        %697 = vmatmul.mubr.bf16.gmra.mrb[0].mxu0 %v617
        %v698 = vpop.f32.mrb[0].mxu0
        %v699 = vadd.f32 %v589, %v698
        %v700 = vpop.f32.mrb[0].mxu0
        %v701 = vpop.f32.mrb[0].mxu0
        %v702 = vadd.f32 %v589, %v701
        %v703 = vpop.f32.mrb[0].mxu0
        %704 = vmatprep.mubr.bf16.mxu0 0
        %705 = vmatmul.mubr.bf16.gmra.mrb[0].mxu0 %v620
        %v706 = vpop.f32.mrb[0].mxu0
        %v707 = vadd.f32 %v589, %v706
        %v708 = vpop.f32.mrb[0].mxu0
        %v709 = vpop.f32.mrb[0].mxu0
        %v710 = vadd.f32 %v589, %v709
        %v711 = vpop.f32.mrb[0].mxu0
        %712 = vmatprep.mubr.bf16.mxu0 0
        %713 = vmatmul.mubr.bf16.gmra.mrb[0].mxu0 %v623
        %v714 = vpop.f32.mrb[0].mxu0
        %v715 = vadd.f32 %v589, %v714
        %v716 = vpop.f32.mrb[0].mxu0
        %v717 = vpop.f32.mrb[0].mxu0
        %v718 = vadd.f32 %v589, %v717
        %v719 = vpop.f32.mrb[0].mxu0
        %720 = vmatprep.mubr.bf16.mxu0 0
        %721 = vmatmul.mubr.bf16.gmra.mrb[0].mxu0 %v626
        %v722 = vpop.f32.mrb[0].mxu0
        %v723 = vadd.f32 %v589, %v722
        %v724 = vpop.f32.mrb[0].mxu0
        %v725 = vpop.f32.mrb[0].mxu0
        %v726 = vadd.f32 %v589, %v725
        %v727 = vpop.f32.mrb[0].mxu0
        %728 = vmatprep.mubr.bf16.mxu0 0
        %729 = vmatmul.mubr.bf16.gmra.mrb[0].mxu0 %v629
        %v730 = vpop.f32.mrb[0].mxu0
        %v731 = vadd.f32 %v589, %v730
        %v732 = vpop.f32.mrb[0].mxu0
        %v733 = vpop.f32.mrb[0].mxu0
        %v734 = vadd.f32 %v589, %v733
        %v735 = vpop.f32.mrb[0].mxu0
        %736 = vmatprep.mubr.bf16.mxu0 0
        %737 = vmatmul.mubr.bf16.gmra.mrb[0].mxu0 %v632
        %v738 = vpop.f32.mrb[0].mxu0
        %v739 = vadd.f32 %v589, %v738
        %v740 = vpop.f32.mrb[0].mxu0
        %v741 = vpop.f32.mrb[0].mxu0
        %v742 = vadd.f32 %v589, %v741
        %v743 = vpop.f32.mrb[0].mxu0
        %744 = vmatprep.mubr.bf16.mxu0 0
        %745 = vmatmul.mubr.bf16.gmra.mrb[0].mxu0 %v635
        %v746 = vpop.f32.mrb[0].mxu0
        %v747 = vadd.f32 %v589, %v746
        %v748 = vpop.f32.mrb[0].mxu0
        %v749 = vpop.f32.mrb[0].mxu0
        %v750 = vadd.f32 %v589, %v749
        %v751 = vpop.f32.mrb[0].mxu0
        %752 = vmatprep.mubr.bf16.mxu0 0
        %753 = vmatmul.mubr.bf16.gmra.mrb[0].mxu0 %v638
        %v754 = vpop.f32.mrb[0].mxu0
        %v755 = vadd.f32 %v589, %v754
        %v756 = vpop.f32.mrb[0].mxu0
        %v757 = vpop.f32.mrb[0].mxu0
        %v758 = vadd.f32 %v589, %v757
        %v759 = vpop.f32.mrb[0].mxu0
        %760 = vmatprep.mubr.bf16.mxu0 0
        %761 = vmatmul.mubr.bf16.gmra.mrb[0].mxu0 %v641
        %v762 = vpop.f32.mrb[0].mxu0
        %v763 = vadd.f32 %v589, %v762
        %v764 = vpop.f32.mrb[0].mxu0
        %v765 = vpop.f32.mrb[0].mxu0
        %v766 = vadd.f32 %v589, %v765
        %v767 = vpop.f32.mrb[0].mxu0
        %768 = vmatprep.mubr.bf16.mxu0 0
        %769 = vmatmul.mubr.bf16.gmra.mrb[0].mxu0 %v644
        %v770 = vpop.f32.mrb[0].mxu0
        %v771 = vadd.f32 %v589, %v770
        %v772 = vpop.f32.mrb[0].mxu0
        %v773 = vpop.f32.mrb[0].mxu0
        %v774 = vadd.f32 %v589, %v773
        %v775 = vpop.f32.mrb[0].mxu0
        %776 = vmatprep.mubr.bf16.mxu0 0
        %777 = vmatmul.mubr.bf16.gmra.mrb[0].mxu0 %v647
        %v778 = vpop.f32.mrb[0].mxu0
        %v779 = vadd.f32 %v589, %v778
        %v780 = vpop.f32.mrb[0].mxu0
        %v781 = vpop.f32.mrb[0].mxu0
        %v782 = vadd.f32 %v589, %v781
        %v783 = vpop.f32.mrb[0].mxu0
        %784 = vmatprep.mubr.bf16.mxu0 0
        %785 = vmatmul.mubr.bf16.gmra.mrb[0].mxu0 %v650
        %v786 = vpop.f32.mrb[0].mxu0
        %v787 = vadd.f32 %v589, %v786
        %v788 = vpop.f32.mrb[0].mxu0
        %v789 = vpop.f32.mrb[0].mxu0
        %v790 = vadd.f32 %v589, %v789
        %v791 = vpop.f32.mrb[0].mxu0
        %792 = vmatprep.mubr.bf16.mxu0 0
        %793 = vmatmul.mubr.bf16.gmra.mrb[0].mxu0 %v653
        %v794 = vpop.f32.mrb[0].mxu0
        %v795 = vadd.f32 %v589, %v794
        %v796 = vpop.f32.mrb[0].mxu0
        %v797 = vpop.f32.mrb[0].mxu0
        %v798 = vadd.f32 %v589, %v797
        %v799 = vpop.f32.mrb[0].mxu0
        %800 = vmatprep.mubr.bf16.mxu0 0
        %801 = vmatmul.mubr.bf16.gmra.mrb[0].mxu0 %v656
        %v802 = vpop.f32.mrb[0].mxu0
        %v803 = vadd.f32 %v589, %v802
        %v804 = vpop.f32.mrb[0].mxu0
        %v805 = vpop.f32.mrb[0].mxu0
        %v806 = vadd.f32 %v589, %v805
        %v807 = vpop.f32.mrb[0].mxu0
        %808 = vmatprep.mubr.bf16.mxu0 0
        %809 = vmatmul.mubr.bf16.gmra.mrb[0].mxu0 %v659
        %v810 = vpop.f32.mrb[0].mxu0
        %v811 = vadd.f32 %v589, %v810
        %v812 = vpop.f32.mrb[0].mxu0
        %v813 = vpop.f32.mrb[0].mxu0
        %v814 = vadd.f32 %v589, %v813
        %v815 = vpop.f32.mrb[0].mxu0
        %816 = vmatprep.mubr.bf16.mxu0 0
        %817 = vmatmul.mubr.bf16.gmra.mrb[0].mxu0 %v662
        %v818 = vpop.f32.mrb[0].mxu0
        %v819 = vadd.f32 %v589, %v818
        %v820 = vpop.f32.mrb[0].mxu0
        %v821 = vpop.f32.mrb[0].mxu0
        %v822 = vadd.f32 %v589, %v821
        %v823 = vpop.f32.mrb[0].mxu0
        %824 = vdwg.mxu0
        %vm825 = vcmask 130048
        %826 = vst.msk [vmem:[%s226] sm:$0xff] %vm825, %v699
        %827 = vst.msk [vmem:[%s226 + $0x8] sm:$0xff] %vm825, %v702
        %828 = vst.msk [vmem:[%s226 + $0x10] sm:$0xff] %vm825, %v707
        %829 = vst.msk [vmem:[%s226 + $0x18] sm:$0xff] %vm825, %v710
        %830 = vst.msk [vmem:[%s226 + $0x20] sm:$0xff] %vm825, %v715
        %831 = vst.msk [vmem:[%s226 + $0x28] sm:$0xff] %vm825, %v718
        %832 = vst.msk [vmem:[%s226 + $0x30] sm:$0xff] %vm825, %v723
        %833 = vst.msk [vmem:[%s226 + $0x38] sm:$0xff] %vm825, %v726
        %834 = vst.msk [vmem:[%s226 + $0x40] sm:$0xff] %vm825, %v731
        %835 = vst.msk [vmem:[%s226 + $0x48] sm:$0xff] %vm825, %v734
        %836 = vst.msk [vmem:[%s226 + $0x50] sm:$0xff] %vm825, %v739
        %837 = vst.msk [vmem:[%s226 + $0x58] sm:$0xff] %vm825, %v742
        %838 = vst.msk [vmem:[%s226 + $0x60] sm:$0xff] %vm825, %v747
        %839 = vst.msk [vmem:[%s226 + $0x68] sm:$0xff] %vm825, %v750
        %840 = vst.msk [vmem:[%s226 + $0x70] sm:$0xff] %vm825, %v755
        %841 = vst.msk [vmem:[%s226 + $0x78] sm:$0xff] %vm825, %v758
        %842 = vst.msk [vmem:[%s226 + $0x80] sm:$0xff] %vm825, %v763
        %843 = vst.msk [vmem:[%s226 + $0x88] sm:$0xff] %vm825, %v766
        %844 = vst.msk [vmem:[%s226 + $0x90] sm:$0xff] %vm825, %v771
        %845 = vst.msk [vmem:[%s226 + $0x98] sm:$0xff] %vm825, %v774
        %846 = vst.msk [vmem:[%s226 + $0xa0] sm:$0xff] %vm825, %v779
        %847 = vst.msk [vmem:[%s226 + $0xa8] sm:$0xff] %vm825, %v782
        %848 = vst.msk [vmem:[%s226 + $0xb0] sm:$0xff] %vm825, %v787
        %849 = vst.msk [vmem:[%s226 + $0xb8] sm:$0xff] %vm825, %v790
        %850 = vst.msk [vmem:[%s226 + $0xc0] sm:$0xff] %vm825, %v795
        %851 = vst.msk [vmem:[%s226 + $0xc8] sm:$0xff] %vm825, %v798
        %852 = vst.msk [vmem:[%s226 + $0xd0] sm:$0xff] %vm825, %v803
        %853 = vst.msk [vmem:[%s226 + $0xd8] sm:$0xff] %vm825, %v806
        %854 = vst.msk [vmem:[%s226 + $0xe0] sm:$0xff] %vm825, %v811
        %855 = vst.msk [vmem:[%s226 + $0xe8] sm:$0xff] %vm825, %v814
        %856 = vst.msk [vmem:[%s226 + $0xf0] sm:$0xff] %vm825, %v819
        %857 = vst.msk [vmem:[%s226 + $0xf8] sm:$0xff] %vm825, %v822
        %s858 = sand.u32 %s134, 1
        %s859 = sand.u32 %s134, 1
        %s860 = smul.addr %s859, 256
        %s861 = scalar_lea.vmem [#allocation2], %s860
        // Predicated region
        $region41: #{tpu_custom_call.1} parent=39 // pred_check
          %p862 = pneg %p144
        $region42: #{tpu_custom_call.1} parent=39 // pred_check_branch
          %864 = sbr.rel (%p862) target = $region44
        $region43: #{tpu_custom_call.1} parent=39 // pred_region
          %s865 = smul.u32 32, %s16
          %s866 = ssub.s32 63, %s865
          %p867 = scmp.lt.s32.totalorder %s866, 32
          %s868 = scalar_select %p867, %s866, 32
          %s869 = smul.u32 128, %s868
          %p870 = scmp.ne.s32.totalorder 0, %s869
          %s871 = smul.addr %s865, 8
          %s872 = scalar_lea.vmem %s5, %s871
          // Predicated region
          $region45: #{tpu_custom_call.1} parent=43 // pred_check
            %p873 = pneg %p870
          $region46: #{tpu_custom_call.1} parent=43 // pred_check_branch
            %875 = sbr.rel (%p873) target = $region48
          $region47: #{tpu_custom_call.1} parent=43 // pred_region
            // Predicated region
            $region49: #{tpu_custom_call.1} parent=47 // pred_check
              _
            $region50: #{tpu_custom_call.1} parent=47 // pred_check_branch
              %877 = sbr.rel (0) target = $region52
            $region51: #{tpu_custom_call.1} parent=47 // pred_region
              // Predicated region
              $region71: #{tpu_custom_call.1} parent=51 // pred_check
                _
              $region72: #{tpu_custom_call.1} parent=51 // pred_check_branch
                %988 = sbr.rel (0) target = $region74
              $region73: #{tpu_custom_call.1} parent=51 // pred_region
                %s989 = sshrl.u32 %s868, 5
                // While loop
                $region75: #{tpu_custom_call.1} parent=73 // loop_pre_header
                  _
                $region76: #{tpu_custom_call.1} parent=73 // loop_header
                  %s991 = sphi 0, %s993
                  %p992 = scmp.ge.s32.totalorder %s991, %s989
                  %s996 = sphi 0, %s1065
                  %s997 = sphi %s861, %s1068
                  %s998 = sphi %s872, %s1069
                $region77: #{tpu_custom_call.1} parent=73 // loop_header_branch
                  %995 = sbr.rel (%p992) target = $region81
                $region78: #{tpu_custom_call.1} parent=73 // loop_body
                  %v999 = vld [vmem:[%s997] sm:$0xff]
                  %1000 = vst [vmem:[%s998] sm:$0xff] %v999
                  %v1001 = vld [vmem:[%s997 + $0x8] sm:$0xff]
                  %1002 = vst [vmem:[%s998 + $0x8] sm:$0xff] %v1001
                  %v1003 = vld [vmem:[%s997 + $0x10] sm:$0xff]
                  %1004 = vst [vmem:[%s998 + $0x10] sm:$0xff] %v1003
                  %v1005 = vld [vmem:[%s997 + $0x18] sm:$0xff]
                  %1006 = vst [vmem:[%s998 + $0x18] sm:$0xff] %v1005
                  %v1007 = vld [vmem:[%s997 + $0x20] sm:$0xff]
                  %1008 = vst [vmem:[%s998 + $0x20] sm:$0xff] %v1007
                  %v1009 = vld [vmem:[%s997 + $0x28] sm:$0xff]
                  %1010 = vst [vmem:[%s998 + $0x28] sm:$0xff] %v1009
                  %v1011 = vld [vmem:[%s997 + $0x30] sm:$0xff]
                  %1012 = vst [vmem:[%s998 + $0x30] sm:$0xff] %v1011
                  %v1013 = vld [vmem:[%s997 + $0x38] sm:$0xff]
                  %1014 = vst [vmem:[%s998 + $0x38] sm:$0xff] %v1013
                  %v1015 = vld [vmem:[%s997 + $0x40] sm:$0xff]
                  %1016 = vst [vmem:[%s998 + $0x40] sm:$0xff] %v1015
                  %v1017 = vld [vmem:[%s997 + $0x48] sm:$0xff]
                  %1018 = vst [vmem:[%s998 + $0x48] sm:$0xff] %v1017
                  %v1019 = vld [vmem:[%s997 + $0x50] sm:$0xff]
                  %1020 = vst [vmem:[%s998 + $0x50] sm:$0xff] %v1019
                  %v1021 = vld [vmem:[%s997 + $0x58] sm:$0xff]
                  %1022 = vst [vmem:[%s998 + $0x58] sm:$0xff] %v1021
                  %v1023 = vld [vmem:[%s997 + $0x60] sm:$0xff]
                  %1024 = vst [vmem:[%s998 + $0x60] sm:$0xff] %v1023
                  %v1025 = vld [vmem:[%s997 + $0x68] sm:$0xff]
                  %1026 = vst [vmem:[%s998 + $0x68] sm:$0xff] %v1025
                  %v1027 = vld [vmem:[%s997 + $0x70] sm:$0xff]
                  %1028 = vst [vmem:[%s998 + $0x70] sm:$0xff] %v1027
                  %v1029 = vld [vmem:[%s997 + $0x78] sm:$0xff]
                  %1030 = vst [vmem:[%s998 + $0x78] sm:$0xff] %v1029
                  %v1031 = vld [vmem:[%s997 + $0x80] sm:$0xff]
                  %1032 = vst [vmem:[%s998 + $0x80] sm:$0xff] %v1031
                  %v1033 = vld [vmem:[%s997 + $0x88] sm:$0xff]
                  %1034 = vst [vmem:[%s998 + $0x88] sm:$0xff] %v1033
                  %v1035 = vld [vmem:[%s997 + $0x90] sm:$0xff]
                  %1036 = vst [vmem:[%s998 + $0x90] sm:$0xff] %v1035
                  %v1037 = vld [vmem:[%s997 + $0x98] sm:$0xff]
                  %1038 = vst [vmem:[%s998 + $0x98] sm:$0xff] %v1037
                  %v1039 = vld [vmem:[%s997 + $0xa0] sm:$0xff]
                  %1040 = vst [vmem:[%s998 + $0xa0] sm:$0xff] %v1039
                  %v1041 = vld [vmem:[%s997 + $0xa8] sm:$0xff]
                  %1042 = vst [vmem:[%s998 + $0xa8] sm:$0xff] %v1041
                  %v1043 = vld [vmem:[%s997 + $0xb0] sm:$0xff]
                  %1044 = vst [vmem:[%s998 + $0xb0] sm:$0xff] %v1043
                  %v1045 = vld [vmem:[%s997 + $0xb8] sm:$0xff]
                  %1046 = vst [vmem:[%s998 + $0xb8] sm:$0xff] %v1045
                  %v1047 = vld [vmem:[%s997 + $0xc0] sm:$0xff]
                  %1048 = vst [vmem:[%s998 + $0xc0] sm:$0xff] %v1047
                  %v1049 = vld [vmem:[%s997 + $0xc8] sm:$0xff]
                  %1050 = vst [vmem:[%s998 + $0xc8] sm:$0xff] %v1049
                  %v1051 = vld [vmem:[%s997 + $0xd0] sm:$0xff]
                  %1052 = vst [vmem:[%s998 + $0xd0] sm:$0xff] %v1051
                  %v1053 = vld [vmem:[%s997 + $0xd8] sm:$0xff]
                  %1054 = vst [vmem:[%s998 + $0xd8] sm:$0xff] %v1053
                  %v1055 = vld [vmem:[%s997 + $0xe0] sm:$0xff]
                  %1056 = vst [vmem:[%s998 + $0xe0] sm:$0xff] %v1055
                  %v1057 = vld [vmem:[%s997 + $0xe8] sm:$0xff]
                  %1058 = vst [vmem:[%s998 + $0xe8] sm:$0xff] %v1057
                  %v1059 = vld [vmem:[%s997 + $0xf0] sm:$0xff]
                  %1060 = vst [vmem:[%s998 + $0xf0] sm:$0xff] %v1059
                  %v1061 = vld [vmem:[%s997 + $0xf8] sm:$0xff]
                  %1062 = vst [vmem:[%s998 + $0xf8] sm:$0xff] %v1061
                  %s1063 = sadd.s32 1, %s996
                  %p1064 = scmp.ge.s32.totalorder %s1063, %s989
                  %s1065 = scalar_select %p1064, 0, %s1063
                  %s1066 = smul.u32 %s1065, 256
                  %s1067 = smul.u32 %s1065, 256
                  %s1068 = scalar_lea.vmem %s861, %s1066 [#allocation2]
                  %s1069 = scalar_lea.vmem %s872, %s1067
                $region79: #{tpu_custom_call.1} parent=73 // loop_footer
                  %s993 = sadd.s32 %s991, 1
                $region80: #{tpu_custom_call.1} parent=73 // loop_footer_branch
                  %990 = sbr.rel target = $region76
                $region81: #{tpu_custom_call.1} parent=73 // loop_exit
                  _
                %s1070 = sshrl.u32 %s868, 5
                %s1071 = sand.u32 %s868, 31
                %s1072 = smul.u32 %s1070, 32
                %s1073 = smul.u32 8, %s1072
                %s1074 = scalar_lea.vmem %s861, %s1073 [#allocation2]
                %s1075 = smul.u32 8, %s1072
                %s1076 = scalar_lea.vmem %s872, %s1075
                // While loop
                $region82: #{tpu_custom_call.1} parent=73 // loop_pre_header
                  _
                $region83: #{tpu_custom_call.1} parent=73 // loop_header
                  %s1078 = sphi 0, %s1080
                  %p1079 = scmp.ge.s32.totalorder %s1078, %s1071
                  %s1083 = sphi 0, %s1090
                  %s1084 = sphi %s1074, %s1093
                  %s1085 = sphi %s1076, %s1094
                $region84: #{tpu_custom_call.1} parent=73 // loop_header_branch
                  %1082 = sbr.rel (%p1079) target = $region88
                $region85: #{tpu_custom_call.1} parent=73 // loop_body
                  %v1086 = vld [vmem:[%s1084] sm:$0xff]
                  %1087 = vst [vmem:[%s1085] sm:$0xff] %v1086
                  %s1088 = sadd.s32 1, %s1083
                  %p1089 = scmp.ge.s32.totalorder %s1088, %s1071
                  %s1090 = scalar_select %p1089, 0, %s1088
                  %s1091 = smul.u32 %s1090, 8
                  %s1092 = smul.u32 %s1090, 8
                  %s1093 = scalar_lea.vmem %s1074, %s1091 [#allocation2]
                  %s1094 = scalar_lea.vmem %s1076, %s1092
                $region86: #{tpu_custom_call.1} parent=73 // loop_footer
                  %s1080 = sadd.s32 %s1078, 1
                $region87: #{tpu_custom_call.1} parent=73 // loop_footer_branch
                  %1077 = sbr.rel target = $region83
                $region88: #{tpu_custom_call.1} parent=73 // loop_exit
                  _
              $region74: #{tpu_custom_call.1} parent=51 // pred_fallthru
                _
              // Predicated region
              $region89: #{tpu_custom_call.1} parent=51 // pred_check
                _
              $region90: #{tpu_custom_call.1} parent=51 // pred_check_branch
                %1096 = sbr.rel target = $region92
              $region91: #{tpu_custom_call.1} parent=51 // pred_region
                _
              $region92: #{tpu_custom_call.1} parent=51 // pred_fallthru
                _
            $region52: #{tpu_custom_call.1} parent=47 // pred_fallthru
              _
            // Predicated region
            $region53: #{tpu_custom_call.1} parent=47 // pred_check
              _
            $region54: #{tpu_custom_call.1} parent=47 // pred_check_branch
              %879 = sbr.rel target = $region56
            $region55: #{tpu_custom_call.1} parent=47 // pred_region
              %s881 = sshrl.u32 %s868, 5
              // While loop
              $region57: #{tpu_custom_call.1} parent=55 // loop_pre_header
                _
              $region58: #{tpu_custom_call.1} parent=55 // loop_header
                %s883 = sphi 0, %s885
                %p884 = scmp.ge.s32.totalorder %s883, %s881
                %s888 = sphi 0, %s957
                %s889 = sphi %s861, %s960
                %s890 = sphi %s872, %s961
              $region59: #{tpu_custom_call.1} parent=55 // loop_header_branch
                %887 = sbr.rel (%p884) target = $region63
              $region60: #{tpu_custom_call.1} parent=55 // loop_body
                %v891 = vld [vmem:[%s889] sm:$0xff]
                %892 = vst [vmem:[%s890] sm:$0xff] %v891
                %v893 = vld [vmem:[%s889 + $0x8] sm:$0xff]
                %894 = vst [vmem:[%s890 + $0x8] sm:$0xff] %v893
                %v895 = vld [vmem:[%s889 + $0x10] sm:$0xff]
                %896 = vst [vmem:[%s890 + $0x10] sm:$0xff] %v895
                %v897 = vld [vmem:[%s889 + $0x18] sm:$0xff]
                %898 = vst [vmem:[%s890 + $0x18] sm:$0xff] %v897
                %v899 = vld [vmem:[%s889 + $0x20] sm:$0xff]
                %900 = vst [vmem:[%s890 + $0x20] sm:$0xff] %v899
                %v901 = vld [vmem:[%s889 + $0x28] sm:$0xff]
                %902 = vst [vmem:[%s890 + $0x28] sm:$0xff] %v901
                %v903 = vld [vmem:[%s889 + $0x30] sm:$0xff]
                %904 = vst [vmem:[%s890 + $0x30] sm:$0xff] %v903
                %v905 = vld [vmem:[%s889 + $0x38] sm:$0xff]
                %906 = vst [vmem:[%s890 + $0x38] sm:$0xff] %v905
                %v907 = vld [vmem:[%s889 + $0x40] sm:$0xff]
                %908 = vst [vmem:[%s890 + $0x40] sm:$0xff] %v907
                %v909 = vld [vmem:[%s889 + $0x48] sm:$0xff]
                %910 = vst [vmem:[%s890 + $0x48] sm:$0xff] %v909
                %v911 = vld [vmem:[%s889 + $0x50] sm:$0xff]
                %912 = vst [vmem:[%s890 + $0x50] sm:$0xff] %v911
                %v913 = vld [vmem:[%s889 + $0x58] sm:$0xff]
                %914 = vst [vmem:[%s890 + $0x58] sm:$0xff] %v913
                %v915 = vld [vmem:[%s889 + $0x60] sm:$0xff]
                %916 = vst [vmem:[%s890 + $0x60] sm:$0xff] %v915
                %v917 = vld [vmem:[%s889 + $0x68] sm:$0xff]
                %918 = vst [vmem:[%s890 + $0x68] sm:$0xff] %v917
                %v919 = vld [vmem:[%s889 + $0x70] sm:$0xff]
                %920 = vst [vmem:[%s890 + $0x70] sm:$0xff] %v919
                %v921 = vld [vmem:[%s889 + $0x78] sm:$0xff]
                %922 = vst [vmem:[%s890 + $0x78] sm:$0xff] %v921
                %v923 = vld [vmem:[%s889 + $0x80] sm:$0xff]
                %924 = vst [vmem:[%s890 + $0x80] sm:$0xff] %v923
                %v925 = vld [vmem:[%s889 + $0x88] sm:$0xff]
                %926 = vst [vmem:[%s890 + $0x88] sm:$0xff] %v925
                %v927 = vld [vmem:[%s889 + $0x90] sm:$0xff]
                %928 = vst [vmem:[%s890 + $0x90] sm:$0xff] %v927
                %v929 = vld [vmem:[%s889 + $0x98] sm:$0xff]
                %930 = vst [vmem:[%s890 + $0x98] sm:$0xff] %v929
                %v931 = vld [vmem:[%s889 + $0xa0] sm:$0xff]
                %932 = vst [vmem:[%s890 + $0xa0] sm:$0xff] %v931
                %v933 = vld [vmem:[%s889 + $0xa8] sm:$0xff]
                %934 = vst [vmem:[%s890 + $0xa8] sm:$0xff] %v933
                %v935 = vld [vmem:[%s889 + $0xb0] sm:$0xff]
                %936 = vst [vmem:[%s890 + $0xb0] sm:$0xff] %v935
                %v937 = vld [vmem:[%s889 + $0xb8] sm:$0xff]
                %938 = vst [vmem:[%s890 + $0xb8] sm:$0xff] %v937
                %v939 = vld [vmem:[%s889 + $0xc0] sm:$0xff]
                %940 = vst [vmem:[%s890 + $0xc0] sm:$0xff] %v939
                %v941 = vld [vmem:[%s889 + $0xc8] sm:$0xff]
                %942 = vst [vmem:[%s890 + $0xc8] sm:$0xff] %v941
                %v943 = vld [vmem:[%s889 + $0xd0] sm:$0xff]
                %944 = vst [vmem:[%s890 + $0xd0] sm:$0xff] %v943
                %v945 = vld [vmem:[%s889 + $0xd8] sm:$0xff]
                %946 = vst [vmem:[%s890 + $0xd8] sm:$0xff] %v945
                %v947 = vld [vmem:[%s889 + $0xe0] sm:$0xff]
                %948 = vst [vmem:[%s890 + $0xe0] sm:$0xff] %v947
                %v949 = vld [vmem:[%s889 + $0xe8] sm:$0xff]
                %950 = vst [vmem:[%s890 + $0xe8] sm:$0xff] %v949
                %v951 = vld [vmem:[%s889 + $0xf0] sm:$0xff]
                %952 = vst [vmem:[%s890 + $0xf0] sm:$0xff] %v951
                %v953 = vld [vmem:[%s889 + $0xf8] sm:$0xff]
                %954 = vst [vmem:[%s890 + $0xf8] sm:$0xff] %v953
                %s955 = sadd.s32 1, %s888
                %p956 = scmp.ge.s32.totalorder %s955, %s881
                %s957 = scalar_select %p956, 0, %s955
                %s958 = smul.u32 %s957, 256
                %s959 = smul.u32 %s957, 256
                %s960 = scalar_lea.vmem %s861, %s958 [#allocation2]
                %s961 = scalar_lea.vmem %s872, %s959
              $region61: #{tpu_custom_call.1} parent=55 // loop_footer
                %s885 = sadd.s32 %s883, 1
              $region62: #{tpu_custom_call.1} parent=55 // loop_footer_branch
                %882 = sbr.rel target = $region58
              $region63: #{tpu_custom_call.1} parent=55 // loop_exit
                _
              %s962 = sshrl.u32 %s868, 5
              %s963 = sand.u32 %s868, 31
              %s964 = smul.u32 %s962, 32
              %s965 = smul.u32 8, %s964
              %s966 = scalar_lea.vmem %s861, %s965 [#allocation2]
              %s967 = smul.u32 8, %s964
              %s968 = scalar_lea.vmem %s872, %s967
              // While loop
              $region64: #{tpu_custom_call.1} parent=55 // loop_pre_header
                _
              $region65: #{tpu_custom_call.1} parent=55 // loop_header
                %s970 = sphi 0, %s972
                %p971 = scmp.ge.s32.totalorder %s970, %s963
                %s975 = sphi 0, %s982
                %s976 = sphi %s966, %s985
                %s977 = sphi %s968, %s986
              $region66: #{tpu_custom_call.1} parent=55 // loop_header_branch
                %974 = sbr.rel (%p971) target = $region70
              $region67: #{tpu_custom_call.1} parent=55 // loop_body
                %v978 = vld [vmem:[%s976] sm:$0xff]
                %979 = vst [vmem:[%s977] sm:$0xff] %v978
                %s980 = sadd.s32 1, %s975
                %p981 = scmp.ge.s32.totalorder %s980, %s963
                %s982 = scalar_select %p981, 0, %s980
                %s983 = smul.u32 %s982, 8
                %s984 = smul.u32 %s982, 8
                %s985 = scalar_lea.vmem %s966, %s983 [#allocation2]
                %s986 = scalar_lea.vmem %s968, %s984
              $region68: #{tpu_custom_call.1} parent=55 // loop_footer
                %s972 = sadd.s32 %s970, 1
              $region69: #{tpu_custom_call.1} parent=55 // loop_footer_branch
                %969 = sbr.rel target = $region65
              $region70: #{tpu_custom_call.1} parent=55 // loop_exit
                _
            $region56: #{tpu_custom_call.1} parent=47 // pred_fallthru
              _
          $region48: #{tpu_custom_call.1} parent=43 // pred_fallthru
            _
          %1097 = vnop
        $region44: #{tpu_custom_call.1} parent=39 // pred_fallthru
          _
      $region40: #{tpu_custom_call.1} parent=5 // pred_fallthru
        _
      %p1098 = scmp.le.s32.totalorder 2, %s11
      // Predicated region
      $region93: #{tpu_custom_call.1} parent=5 // pred_check
        %p1099 = pneg %p1098
      $region94: #{tpu_custom_call.1} parent=5 // pred_check_branch
        %1101 = sbr.rel (%p1099) target = $region96
      $region95: #{tpu_custom_call.1} parent=5 // pred_region
        %s1102 = ssub.s32 %s11, 2
        // Predicated region
        $region97: #{tpu_custom_call.1} parent=95 // pred_check
          %p1103 = pneg %p150
        $region98: #{tpu_custom_call.1} parent=95 // pred_check_branch
          %1105 = sbr.rel (%p1103) target = $region100
        $region99: #{tpu_custom_call.1} parent=95 // pred_region
          %s1106 = sand.u32 %s135, 1
          %s1107 = sand.u32 %s135, 1
          %s1108 = smul.addr %s1107, 256
          %s1109 = scalar_lea.vmem [#allocation2], %s1108
        $region100: #{tpu_custom_call.1} parent=95 // pred_fallthru
          _
      $region96: #{tpu_custom_call.1} parent=5 // pred_fallthru
        _
    $region6: #{tpu_custom_call.1} parent=1 // loop_footer
      %s15 = sadd.s32 1, %s11
    $region7: #{tpu_custom_call.1} parent=1 // loop_footer_branch
      %10 = sbr.rel target = $region3
    $region8: #{tpu_custom_call.1} parent=1 // loop_exit
      _

</llo_original>
